<compile_context>
chip_gen: v5e
topology: v5e:2x2
jax: 0.10.0
libtpu: 0.0.40
codegen_flags: <defaults>
</compile_context>

<pallas_src>
import math

import jax
import jax.numpy as jnp
from jax.experimental import pallas as pl
from jax.experimental.pallas import tpu as pltpu

LN_EPS = 1e-5  # torch.nn.LayerNorm default


def _layernorm(v):
    """elementwise_affine=False LayerNorm over the last axis (biased variance).

    Two-pass (centered) moments: numerically safe and matches torch.nn.LayerNorm.
    """
    mu = jnp.mean(v, axis=-1, keepdims=True)
    c = v - mu
    var = jnp.mean(c * c, axis=-1, keepdims=True)
    return c * jax.lax.rsqrt(var + LN_EPS)


def gru_cell_kernel(x_ref, h_ref,
                    wx_ref, bx_ref,   # fused x-side: (I, 3H), (1, 3H) = [i2h | h_hat_W]
                    wh_ref, bh_ref,   # fused h-side: (H, 3H), (1, 3H) = [h2h | h_hat_U]
                    out_ref):
    hidden = out_ref.shape[-1]

    x = x_ref[...]                      # bf16 (cast at the call boundary)
    h = h_ref[...]                      # input dtype; full precision for the blend

    # Two fused GEMMs: bf16 operands, f32 accumulation on the MXU, f32 bias add.
    xp = jnp.dot(x, wx_ref[...], preferred_element_type=jnp.float32) \
        + bx_ref[...].astype(jnp.float32)
    hp = jnp.dot(h.astype(wh_ref.dtype), wh_ref[...],
                 preferred_element_type=jnp.float32) \
        + bh_ref[...].astype(jnp.float32)

    # Gate path: LayerNorm over the full 2H block (as in the torch module), sigmoid.
    i2h = _layernorm(xp[:, : 2 * hidden])
    h2h = _layernorm(hp[:, : 2 * hidden])
    gates = jax.nn.sigmoid(i2h + h2h)
    z_t = gates[:, :hidden]
    r_t = gates[:, hidden:]             # == gates[:, -hidden:]

    # Candidate path: per-H LayerNorms, tanh (EUP).
    hh_first = _layernorm(xp[:, 2 * hidden:])
    hh_last = _layernorm(hp[:, 2 * hidden:])
    h_hat = jnp.tanh(hh_first + r_t * hh_last)

    h_f32 = h.astype(jnp.float32)
    h_t = (1.0 - z_t) * h_f32 + z_t * h_hat
    out_ref[...] = h_t.astype(out_ref.dtype)


# ---------------------------------------------------------------------------
# VMEM / tiling helpers
# ---------------------------------------------------------------------------
def _vmem_capacity_bytes():
    try:
        return int(pltpu.get_tpu_info().vmem_capacity_bytes)
    except Exception:   # query unavailable: be conservative (v7x size)
        return 64 << 20


def _act_tile_bytes(tb, input_size, hidden, x_itemsize, h_itemsize):
    """Per-tile VMEM: double-buffered activation tiles + f32 epilogue temporaries."""
    three_h = 3 * hidden
    acts = 2 * tb * input_size * x_itemsize        # x tile (double-buffered)
    acts += 2 * tb * hidden * h_itemsize           # h tile
    acts += 2 * tb * hidden * h_itemsize           # out tile
    temps = 6 * tb * three_h * 4                   # xp/hp + LN/gate f32 temporaries
    return acts + temps


def _weight_bytes(input_size, hidden, w_itemsize):
    three_h = 3 * hidden
    return (input_size + hidden) * three_h * w_itemsize + 2 * three_h * 4


def _vmem_budget_bytes(tb, input_size, hidden, x_itemsize, h_itemsize,
                       w_itemsize, capacity):
    est = (_weight_bytes(input_size, hidden, w_itemsize)       # Buffered(1): 1 copy
           + _act_tile_bytes(tb, input_size, hidden, x_itemsize, h_itemsize)
           + (4 << 20))                                        # compiler slack
    hard_cap = int(capacity * 0.8)   # never request all of physical VMEM
    return int(min(max(est, 16 << 20), hard_cap))


def _pick_batch_tile(batch, input_size, hidden, x_itemsize, h_itemsize, capacity):
    """MXU/VMEM-aware batch tile.

    Prefers large (8,128)-friendly multiples that divide the batch, fit within
    the VMEM headroom, and leave >= 2 grid steps so the 'parallel' axis can
    shard across v7x's two TensorCores.
    """
    if batch <= 8:
        return batch
    budget = int(capacity * 0.5)       # headroom for weights + compiler scratch
    candidates = [t for t in (512, 384, 256, 128, 64, 32, 16, 8) if batch % t == 0]
    if not candidates:
        return batch                   # odd batch: single full-batch block
    fitting = [t for t in candidates
               if _act_tile_bytes(t, input_size, hidden,
                                  x_itemsize, h_itemsize) <= budget]
    if not fitting:
        return candidates[-1]
    multi = [t for t in fitting if batch // t >= 2]
    return multi[0] if multi else fitting[0]


def _invariant_spec(shape):
    """BlockSpec for a grid-invariant operand (weights/biases): single VMEM copy."""
    index_map = lambda i: (0, 0)
    try:
        return pl.BlockSpec(shape, index_map, pipeline_mode=pl.Buffered(1))
    except TypeError:   # older JAX without pipeline_mode kwarg
        return pl.BlockSpec(shape, index_map)


# ---------------------------------------------------------------------------
# Wrapper
# ---------------------------------------------------------------------------
def layer_norm_gru_cell(x, h, params, *, tb=None, mxu_dtype=jnp.bfloat16,
                        donate_h=False):
    """x: (B, input_size), h: (B, hidden_size) -> h_t: (B, hidden_size)."""
    batch, input_size = x.shape
    hidden = h.shape[1]

    # bf16 MXU operands (cast once at the boundary); biases/epilogue stay f32.
    x_m = x.astype(mxu_dtype)
    wx = params["wx"].astype(mxu_dtype)
    wh = params["wh"].astype(mxu_dtype)
    bx = params["bx"].astype(jnp.float32)
    bh = params["bh"].astype(jnp.float32)

    capacity = _vmem_capacity_bytes()
    x_isz = jnp.dtype(mxu_dtype).itemsize
    h_isz = jnp.dtype(h.dtype).itemsize
    if tb is None:
        tb = _pick_batch_tile(batch, input_size, hidden, x_isz, h_isz, capacity)

    grid = (pl.cdiv(batch, tb),)
    act_map = lambda i: (i, 0)

    in_specs = [
        pl.BlockSpec((tb, input_size), act_map),       # x tile
        pl.BlockSpec((tb, hidden), act_map),           # h tile
        _invariant_spec((input_size, 3 * hidden)),     # Wx (resident, 1 buffer)
        _invariant_spec((1, 3 * hidden)),              # bx
        _invariant_spec((hidden, 3 * hidden)),         # Wh
        _invariant_spec((1, 3 * hidden)),              # bh
    ]
    out_specs = pl.BlockSpec((tb, hidden), act_map)

    return pl.pallas_call(
        gru_cell_kernel,
        out_shape=jax.ShapeDtypeStruct((batch, hidden), h.dtype),
        grid=grid,
        in_specs=in_specs,
        out_specs=out_specs,
        # In recurrent use (old h dead after the step) alias h -> h_t.
        input_output_aliases=({1: 0} if donate_h else {}),
        compiler_params=pltpu.CompilerParams(
            dimension_semantics=("parallel",),
            vmem_limit_bytes=_vmem_budget_bytes(
                tb, input_size, hidden, x_isz, h_isz, x_isz, capacity),
        ),
    )(x_m, h, wx, bx, wh, bh)


# ---------------------------------------------------------------------------
# Parameter init + pure-JAX reference
# ---------------------------------------------------------------------------
def init_params(key, input_size, hidden_size, dtype=jnp.float32):
    """Init matching reset_parameters: U(-1/sqrt(H), 1/sqrt(H)).

    Weights are stored transposed ((in, out)) relative to torch.nn.Linear and
    pre-fused: x-side = [i2h | h_hat_W] -> (I, 3H); h-side = [h2h | h_hat_U]
    -> (H, 3H); biases likewise (1, 3H).  Master copies are f32; the wrapper
    casts MXU operands to bf16 at the call boundary.
    """
    std = 1.0 / math.sqrt(hidden_size)
    ks = jax.random.split(key, 8)
    u = lambda k, shape: jax.random.uniform(k, shape, dtype, minval=-std, maxval=std)
    wi = u(ks[0], (input_size, 2 * hidden_size))
    bi = u(ks[1], (1, 2 * hidden_size))
    wh = u(ks[2], (hidden_size, 2 * hidden_size))
    bh = u(ks[3], (1, 2 * hidden_size))
    ww = u(ks[4], (input_size, hidden_size))
    bw = u(ks[5], (1, hidden_size))
    wu = u(ks[6], (hidden_size, hidden_size))
    bu = u(ks[7], (1, hidden_size))
    return {
        "wx": jnp.concatenate([wi, ww], axis=1),   # (I, 3H)
        "bx": jnp.concatenate([bi, bw], axis=1),   # (1, 3H)
        "wh": jnp.concatenate([wh, wu], axis=1),   # (H, 3H)
        "bh": jnp.concatenate([bh, bu], axis=1),   # (1, 3H)
    }


def reference_forward(x, h, p, mxu_dtype=jnp.bfloat16):
    """Pure-JAX reference mirroring the PyTorch module, with the same dtype
    policy as the kernel (bf16 matmul operands, f32 accumulation/epilogue)."""
    hid = h.shape[1]
    xp = jnp.dot(x.astype(mxu_dtype), p["wx"].astype(mxu_dtype),
                 preferred_element_type=jnp.float32) + p["bx"].astype(jnp.float32)
    hp = jnp.dot(h.astype(mxu_dtype), p["wh"].astype(mxu_dtype),
                 preferred_element_type=jnp.float32) + p["bh"].astype(jnp.float32)
    i2h = _layernorm(xp[:, : 2 * hid])
    h2h = _layernorm(hp[:, : 2 * hid])
    gates = jax.nn.sigmoid(i2h + h2h)
    z_t, r_t = gates[:, :hid], gates[:, -hid:]
    hh1 = _layernorm(xp[:, 2 * hid:])
    hh2 = _layernorm(hp[:, 2 * hid:])
    h_hat = jnp.tanh(hh1 + r_t * hh2)
    h_t = (1.0 - z_t) * h.astype(jnp.float32) + z_t * h_hat
    return h_t.astype(h.dtype)


if __name__ == "__main__":
    key = jax.random.PRNGKey(0)
    k_param, k_x, k_h = jax.random.split(key, 3)

    # Small shapes; batch > tile so the batch grid, weight residency and the
    # >=2-grid-step (dual-TC) path are exercised.
    batch, input_size, hidden_size = 32, 16, 32
    params = init_params(k_param, input_size, hidden_size)
    x = jax.random.normal(k_x, (batch, input_size), jnp.float32)
    h = jax.random.normal(k_h, (batch, hidden_size), jnp.float32)

    h_t = layer_norm_gru_cell(x, h, params)   # auto tile -> tb=16, grid=(2,)
    h_t = jax.block_until_ready(h_t)

    ref = reference_forward(x, h, params)
    assert h_t.shape == (batch, hidden_size)
    assert h_t.dtype == h.dtype
    err = float(jnp.max(jnp.abs(h_t - ref)))
    assert jnp.allclose(h_t, ref, atol=2e-3, rtol=2e-3), f"max abs err {err}"

    print("KERNEL_OK")
</pallas_src>

<mosaic_0001>
module attributes {stable_mosaic.version = 11 : i64} {
  func.func @gru_cell_kernel(%arg0: i32, %arg1: memref<16x16xbf16, #tpu.memory_space<vmem>>, %arg2: memref<16x32xf32, #tpu.memory_space<vmem>>, %arg3: memref<16x96xbf16, #tpu.memory_space<vmem>>, %arg4: memref<1x96xf32, #tpu.memory_space<vmem>>, %arg5: memref<32x96xbf16, #tpu.memory_space<vmem>>, %arg6: memref<1x96xf32, #tpu.memory_space<vmem>>, %arg7: memref<16x32xf32, #tpu.memory_space<vmem>>) attributes {dimension_semantics = [#tpu.dimension_semantics<parallel>], iteration_bounds = array<i64: 2>, scalar_prefetch = 0 : i64, scratch_operands = 0 : i64, tpu.core_type = #tpu.core_type<tc>, window_params = [{transform_indices = @transform_0, window_bounds = array<i64: 16, 16>}, {transform_indices = @transform_1, window_bounds = array<i64: 16, 32>}, {pipeline_mode = #tpu.pipeline_mode<synchronous>, transform_indices = @transform_2, window_bounds = array<i64: 16, 96>}, {pipeline_mode = #tpu.pipeline_mode<synchronous>, transform_indices = @transform_3, window_bounds = array<i64: 1, 96>}, {pipeline_mode = #tpu.pipeline_mode<synchronous>, transform_indices = @transform_4, window_bounds = array<i64: 32, 96>}, {pipeline_mode = #tpu.pipeline_mode<synchronous>, transform_indices = @transform_5, window_bounds = array<i64: 1, 96>}, {transform_indices = @transform_6, window_bounds = array<i64: 16, 32>}]} {
    %c0 = arith.constant 0 : index
    %c0_0 = arith.constant 0 : index
    %0 = vector.load %arg1[%c0, %c0_0] : memref<16x16xbf16, #tpu.memory_space<vmem>>, vector<16x16xbf16>
    %c0_1 = arith.constant 0 : index
    %c0_2 = arith.constant 0 : index
    %1 = vector.load %arg2[%c0_1, %c0_2] : memref<16x32xf32, #tpu.memory_space<vmem>>, vector<16x32xf32>
    %c0_3 = arith.constant 0 : index
    %c0_4 = arith.constant 0 : index
    %2 = vector.load %arg3[%c0_3, %c0_4] : memref<16x96xbf16, #tpu.memory_space<vmem>>, vector<16x96xbf16>
    %cst = arith.constant dense<0.000000e+00> : vector<16x96xf32>
    %3 = tpu.matmul %0, %2, %cst {dimension_numbers = #tpu.dot_dimension_numbers<[1], [0], [0], [1], [0, 0, 1, 1], [], []>} : vector<16x16xbf16>, vector<16x96xbf16>, vector<16x96xf32> -> vector<16x96xf32>
    %c0_5 = arith.constant 0 : index
    %c0_6 = arith.constant 0 : index
    %4 = vector.load %arg4[%c0_5, %c0_6] : memref<1x96xf32, #tpu.memory_space<vmem>>, vector<1x96xf32>
    %5 = vector.broadcast %4 : vector<1x96xf32> to vector<16x96xf32>
    %6 = arith.addf %3, %5 : vector<16x96xf32>
    %7 = arith.truncf %1 : vector<16x32xf32> to vector<16x32xbf16>
    %c0_7 = arith.constant 0 : index
    %c0_8 = arith.constant 0 : index
    %8 = vector.load %arg5[%c0_7, %c0_8] : memref<32x96xbf16, #tpu.memory_space<vmem>>, vector<32x96xbf16>
    %cst_9 = arith.constant dense<0.000000e+00> : vector<16x96xf32>
    %9 = tpu.matmul %7, %8, %cst_9 {dimension_numbers = #tpu.dot_dimension_numbers<[1], [0], [0], [1], [0, 0, 1, 1], [], []>} : vector<16x32xbf16>, vector<32x96xbf16>, vector<16x96xf32> -> vector<16x96xf32>
    %c0_10 = arith.constant 0 : index
    %c0_11 = arith.constant 0 : index
    %10 = vector.load %arg6[%c0_10, %c0_11] : memref<1x96xf32, #tpu.memory_space<vmem>>, vector<1x96xf32>
    %11 = vector.broadcast %10 : vector<1x96xf32> to vector<16x96xf32>
    %12 = arith.addf %9, %11 : vector<16x96xf32>
    %13 = vector.extract_strided_slice %6 {offsets = [0, 0], sizes = [16, 64], strides = [1, 1]} : vector<16x96xf32> to vector<16x64xf32>
    %cst_12 = arith.constant dense<0.000000e+00> : vector<16xf32>
    %14 = vector.multi_reduction <add>, %13, %cst_12 [1] : vector<16x64xf32> to vector<16xf32>
    %15 = vector.shape_cast %14 : vector<16xf32> to vector<16x1xf32>
    %cst_13 = arith.constant 6.400000e+01 : f32
    %16 = vector.broadcast %cst_13 : f32 to vector<16x1xf32>
    %17 = arith.divf %15, %16 : vector<16x1xf32>
    %18 = vector.broadcast %17 : vector<16x1xf32> to vector<16x64xf32>
    %19 = arith.subf %13, %18 : vector<16x64xf32>
    %20 = arith.mulf %19, %19 : vector<16x64xf32>
    %cst_14 = arith.constant dense<0.000000e+00> : vector<16xf32>
    %21 = vector.multi_reduction <add>, %20, %cst_14 [1] : vector<16x64xf32> to vector<16xf32>
    %22 = vector.shape_cast %21 : vector<16xf32> to vector<16x1xf32>
    %cst_15 = arith.constant 6.400000e+01 : f32
    %23 = vector.broadcast %cst_15 : f32 to vector<16x1xf32>
    %24 = arith.divf %22, %23 : vector<16x1xf32>
    %cst_16 = arith.constant 9.99999974E-6 : f32
    %25 = vector.broadcast %cst_16 : f32 to vector<16x1xf32>
    %26 = arith.addf %24, %25 : vector<16x1xf32>
    %27 = math.rsqrt %26 : vector<16x1xf32>
    %28 = vector.broadcast %27 : vector<16x1xf32> to vector<16x64xf32>
    %29 = arith.mulf %19, %28 : vector<16x64xf32>
    %30 = vector.extract_strided_slice %12 {offsets = [0, 0], sizes = [16, 64], strides = [1, 1]} : vector<16x96xf32> to vector<16x64xf32>
    %cst_17 = arith.constant dense<0.000000e+00> : vector<16xf32>
    %31 = vector.multi_reduction <add>, %30, %cst_17 [1] : vector<16x64xf32> to vector<16xf32>
    %32 = vector.shape_cast %31 : vector<16xf32> to vector<16x1xf32>
    %cst_18 = arith.constant 6.400000e+01 : f32
    %33 = vector.broadcast %cst_18 : f32 to vector<16x1xf32>
    %34 = arith.divf %32, %33 : vector<16x1xf32>
    %35 = vector.broadcast %34 : vector<16x1xf32> to vector<16x64xf32>
    %36 = arith.subf %30, %35 : vector<16x64xf32>
    %37 = arith.mulf %36, %36 : vector<16x64xf32>
    %cst_19 = arith.constant dense<0.000000e+00> : vector<16xf32>
    %38 = vector.multi_reduction <add>, %37, %cst_19 [1] : vector<16x64xf32> to vector<16xf32>
    %39 = vector.shape_cast %38 : vector<16xf32> to vector<16x1xf32>
    %cst_20 = arith.constant 6.400000e+01 : f32
    %40 = vector.broadcast %cst_20 : f32 to vector<16x1xf32>
    %41 = arith.divf %39, %40 : vector<16x1xf32>
    %cst_21 = arith.constant 9.99999974E-6 : f32
    %42 = vector.broadcast %cst_21 : f32 to vector<16x1xf32>
    %43 = arith.addf %41, %42 : vector<16x1xf32>
    %44 = math.rsqrt %43 : vector<16x1xf32>
    %45 = vector.broadcast %44 : vector<16x1xf32> to vector<16x64xf32>
    %46 = arith.mulf %36, %45 : vector<16x64xf32>
    %47 = arith.addf %29, %46 : vector<16x64xf32>
    %48 = arith.negf %47 : vector<16x64xf32>
    %49 = math.exp %48 : vector<16x64xf32>
    %cst_22 = arith.constant 1.000000e+00 : f32
    %50 = vector.broadcast %cst_22 : f32 to vector<16x64xf32>
    %51 = arith.addf %50, %49 : vector<16x64xf32>
    %52 = arith.divf %50, %51 : vector<16x64xf32>
    %53 = vector.extract_strided_slice %52 {offsets = [0, 0], sizes = [16, 32], strides = [1, 1]} : vector<16x64xf32> to vector<16x32xf32>
    %54 = vector.extract_strided_slice %52 {offsets = [0, 32], sizes = [16, 32], strides = [1, 1]} : vector<16x64xf32> to vector<16x32xf32>
    %55 = vector.extract_strided_slice %6 {offsets = [0, 64], sizes = [16, 32], strides = [1, 1]} : vector<16x96xf32> to vector<16x32xf32>
    %cst_23 = arith.constant dense<0.000000e+00> : vector<16xf32>
    %56 = vector.multi_reduction <add>, %55, %cst_23 [1] : vector<16x32xf32> to vector<16xf32>
    %57 = vector.shape_cast %56 : vector<16xf32> to vector<16x1xf32>
    %cst_24 = arith.constant 3.200000e+01 : f32
    %58 = vector.broadcast %cst_24 : f32 to vector<16x1xf32>
    %59 = arith.divf %57, %58 : vector<16x1xf32>
    %60 = vector.broadcast %59 : vector<16x1xf32> to vector<16x32xf32>
    %61 = arith.subf %55, %60 : vector<16x32xf32>
    %62 = arith.mulf %61, %61 : vector<16x32xf32>
    %cst_25 = arith.constant dense<0.000000e+00> : vector<16xf32>
    %63 = vector.multi_reduction <add>, %62, %cst_25 [1] : vector<16x32xf32> to vector<16xf32>
    %64 = vector.shape_cast %63 : vector<16xf32> to vector<16x1xf32>
    %cst_26 = arith.constant 3.200000e+01 : f32
    %65 = vector.broadcast %cst_26 : f32 to vector<16x1xf32>
    %66 = arith.divf %64, %65 : vector<16x1xf32>
    %cst_27 = arith.constant 9.99999974E-6 : f32
    %67 = vector.broadcast %cst_27 : f32 to vector<16x1xf32>
    %68 = arith.addf %66, %67 : vector<16x1xf32>
    %69 = math.rsqrt %68 : vector<16x1xf32>
    %70 = vector.broadcast %69 : vector<16x1xf32> to vector<16x32xf32>
    %71 = arith.mulf %61, %70 : vector<16x32xf32>
    %72 = vector.extract_strided_slice %12 {offsets = [0, 64], sizes = [16, 32], strides = [1, 1]} : vector<16x96xf32> to vector<16x32xf32>
    %cst_28 = arith.constant dense<0.000000e+00> : vector<16xf32>
    %73 = vector.multi_reduction <add>, %72, %cst_28 [1] : vector<16x32xf32> to vector<16xf32>
    %74 = vector.shape_cast %73 : vector<16xf32> to vector<16x1xf32>
    %cst_29 = arith.constant 3.200000e+01 : f32
    %75 = vector.broadcast %cst_29 : f32 to vector<16x1xf32>
    %76 = arith.divf %74, %75 : vector<16x1xf32>
    %77 = vector.broadcast %76 : vector<16x1xf32> to vector<16x32xf32>
    %78 = arith.subf %72, %77 : vector<16x32xf32>
    %79 = arith.mulf %78, %78 : vector<16x32xf32>
    %cst_30 = arith.constant dense<0.000000e+00> : vector<16xf32>
    %80 = vector.multi_reduction <add>, %79, %cst_30 [1] : vector<16x32xf32> to vector<16xf32>
    %81 = vector.shape_cast %80 : vector<16xf32> to vector<16x1xf32>
    %cst_31 = arith.constant 3.200000e+01 : f32
    %82 = vector.broadcast %cst_31 : f32 to vector<16x1xf32>
    %83 = arith.divf %81, %82 : vector<16x1xf32>
    %cst_32 = arith.constant 9.99999974E-6 : f32
    %84 = vector.broadcast %cst_32 : f32 to vector<16x1xf32>
    %85 = arith.addf %83, %84 : vector<16x1xf32>
    %86 = math.rsqrt %85 : vector<16x1xf32>
    %87 = vector.broadcast %86 : vector<16x1xf32> to vector<16x32xf32>
    %88 = arith.mulf %78, %87 : vector<16x32xf32>
    %89 = arith.mulf %54, %88 : vector<16x32xf32>
    %90 = arith.addf %71, %89 : vector<16x32xf32>
    %91 = math.tanh %90 : vector<16x32xf32>
    %cst_33 = arith.constant 1.000000e+00 : f32
    %92 = vector.broadcast %cst_33 : f32 to vector<16x32xf32>
    %93 = arith.subf %92, %53 : vector<16x32xf32>
    %94 = arith.mulf %93, %1 : vector<16x32xf32>
    %95 = arith.mulf %53, %91 : vector<16x32xf32>
    %96 = arith.addf %94, %95 : vector<16x32xf32>
    %c0_34 = arith.constant 0 : index
    %c0_35 = arith.constant 0 : index
    %97 = vector.load %arg7[%c0_34, %c0_35] : memref<16x32xf32, #tpu.memory_space<vmem>>, vector<16x32xf32>
    tpu.vector_store %arg7[%c0_34, %c0_35], %96 {strides = array<i32>} : memref<16x32xf32, #tpu.memory_space<vmem>>, vector<16x32xf32>,
    return
  }
  func.func @transform_0(%arg0: i32) -> (i32, i32) {
    %c0_i32 = arith.constant 0 : i32
    %c0_i32_0 = arith.constant 0 : i32
    return %arg0, %c0_i32 : i32, i32
  }
  func.func @transform_1(%arg0: i32) -> (i32, i32) {
    %c0_i32 = arith.constant 0 : i32
    %c0_i32_0 = arith.constant 0 : i32
    return %arg0, %c0_i32 : i32, i32
  }
  func.func @transform_2(%arg0: i32) -> (i32, i32) {
    %c0_i32 = arith.constant 0 : i32
    %c0_i32_0 = arith.constant 0 : i32
    %c0_i32_1 = arith.constant 0 : i32
    return %c0_i32, %c0_i32_0 : i32, i32
  }
  func.func @transform_3(%arg0: i32) -> (i32, i32) {
    %c0_i32 = arith.constant 0 : i32
    %c0_i32_0 = arith.constant 0 : i32
    %c0_i32_1 = arith.constant 0 : i32
    return %c0_i32, %c0_i32_0 : i32, i32
  }
  func.func @transform_4(%arg0: i32) -> (i32, i32) {
    %c0_i32 = arith.constant 0 : i32
    %c0_i32_0 = arith.constant 0 : i32
    %c0_i32_1 = arith.constant 0 : i32
    return %c0_i32, %c0_i32_0 : i32, i32
  }
  func.func @transform_5(%arg0: i32) -> (i32, i32) {
    %c0_i32 = arith.constant 0 : i32
    %c0_i32_0 = arith.constant 0 : i32
    %c0_i32_1 = arith.constant 0 : i32
    return %c0_i32, %c0_i32_0 : i32, i32
  }
  func.func @transform_6(%arg0: i32) -> (i32, i32) {
    %c0_i32 = arith.constant 0 : i32
    %c0_i32_0 = arith.constant 0 : i32
    return %arg0, %c0_i32 : i32, i32
  }
}

</mosaic_0001>

<llo_original>
// kernel: tpu_custom_call.1
$region0: #{tpu_custom_call.1}
  #allocation0 [shape = 'u32[]', space=smem, size = 0x4, offset = 0x4, fixed_abs, tag = 'smem constant byte address 0x4 - core index']
  #allocation1 [shape = 'u32[72,128]{1,0:T(1,128)}', space=vmem, size = 0x9000, scoped, tag = 'internal scratch']
  %s0 = inlined_call_operand.vmem [shape: bf16[32,16], index: 0, kind: input, shape index: {}]
  %s1 = inlined_call_operand.hbm [shape: f32[32,32], index: 1, kind: input, shape index: {}]
  %s2 = inlined_call_operand.vmem [shape: bf16[16,96], index: 2, kind: input, shape index: {}]
  %s3 = inlined_call_operand.vmem [shape: f32[1,96], index: 3, kind: input, shape index: {}]
  %s4 = inlined_call_operand.vmem [shape: bf16[32,96], index: 4, kind: input, shape index: {}]
  %s5 = inlined_call_operand.vmem [shape: f32[1,96], index: 5, kind: input, shape index: {}]
  %s6 = inlined_call_operand.hbm [shape: f32[32,32], index: 6, kind: output, shape index: {}]
  %s7 = sld [smem:[#allocation0]]
  $region61: #{tpu_custom_call.1} parent=0
    _
  %s9 = ssub.s32 1, %s7
  %s10 = scalar_select 0, %s9, %s7
  $region1: #{tpu_custom_call.1} parent=0
    #allocation2 [shape = 'u8[16384]{0}', space=vmem, size = 0x4000, scoped, tag = 'input window, operand 1']
    #allocation3 [shape = 's32[2]{0}', space=sflag, size = 0x8, scoped, tag = 'scoped memory for tpu_custom_call.1']
    #allocation4 [shape = 's32[2]{0}', space=sflag, size = 0x8, scoped, tag = 'scoped memory for tpu_custom_call.1']
    #allocation5 [shape = 'u8[16384]{0}', space=vmem, size = 0x4000, scoped, tag = 'output window, operand 0']
    %11 = vsyncpa [#allocation3], 0
    %s12 = scalar_lea.sflag [#allocation3], 1
    %13 = vsyncpa %s12, 0
    %14 = vsyncpa [#allocation4], 0
    %s15 = scalar_lea.sflag [#allocation4], 1
    %16 = vsyncpa %s15, 0
    loop: start=0, step=1, limit=4
    $region2: #{tpu_custom_call.1} parent=1 // loop_pre_header
      _
    $region3: #{tpu_custom_call.1} parent=1 // loop_header
      %s18 = sphi 0, %s22
      %p19 = scmp.ge.s32.totalorder %s18, 4
      %s28 = sphi 0, %s30
      %s31 = sphi 0, %s28
      %s32 = sphi 0, %s31
      %s48 = sphi 0, %s32
      %s54 = sphi 0, %s56
      %s57 = sphi 0, %s54
      %s58 = sphi 0, %s57
      %s74 = sphi 0, %s58
      %s78 = sphi 0, %s78
      %s80 = sphi 0, %s78
      %s81 = sphi 0, %s80
      %s95 = sphi 0, %s81
      %s99 = sphi 0, %s99
      %s101 = sphi 0, %s99
      %s102 = sphi 0, %s101
      %s116 = sphi 0, %s102
      %s120 = sphi 0, %s120
      %s122 = sphi 0, %s120
      %s123 = sphi 0, %s122
      %s137 = sphi 0, %s123
      %s141 = sphi 0, %s141
      %s143 = sphi 0, %s141
      %s144 = sphi 0, %s143
      %s158 = sphi 0, %s144
      %s164 = sphi 0, %s166
      %s167 = sphi 0, %s164
      %s168 = sphi 0, %s167
      %s184 = sphi 0, %s168
    $region4: #{tpu_custom_call.1} parent=1 // loop_header_branch
      %21 = sbr.rel (%p19) target = $region8
    $region5: #{tpu_custom_call.1} parent=1 // loop_body
      %s23 = ssub.s32 %s18, 1
      %s24 = ssub.s32 %s18, 2
      %s25 = sadd.s32 %s18, 1
      %s26 = ssub.s32 %s18, %s25
      %p27 = scmp.eq.s32.totalorder %s26, 0
      %s29 = sadd.s32 %s28, 1
      %s30 = scalar_select %p27, %s28, %s29
      %p33 = pneg %p27
      %p34 = scmp.eq.s32.totalorder %s18, 1
      %p35 = por %p33, %p34
      %p36 = scmp.ne.s32.totalorder %s28, %s31
      %p37 = scmp.eq.s32.totalorder %s18, 0
      %p38 = por %p36, %p37
      %p39 = scmp.ne.s32.totalorder %s28, %s31
      %p40 = scmp.eq.s32.totalorder %s23, 1
      %p41 = por %p39, %p40
      %p42 = scmp.ne.s32.totalorder %s31, %s32
      %p43 = scmp.eq.s32.totalorder %s23, 0
      %p44 = por %p42, %p43
      %p45 = scmp.ne.s32.totalorder %s31, %s32
      %p46 = scmp.eq.s32.totalorder %s24, 1
      %p47 = por %p45, %p46
      %p49 = scmp.ne.s32.totalorder %s32, %s48
      %p50 = scmp.eq.s32.totalorder %s24, 0
      %p51 = por %p49, %p50
      %s52 = ssub.s32 %s18, %s25
      %p53 = scmp.eq.s32.totalorder %s52, 0
      %s55 = sadd.s32 %s54, 1
      %s56 = scalar_select %p53, %s54, %s55
      %p59 = pneg %p53
      %p60 = scmp.eq.s32.totalorder %s18, 1
      %p61 = por %p59, %p60
      %p62 = scmp.ne.s32.totalorder %s54, %s57
      %p63 = scmp.eq.s32.totalorder %s18, 0
      %p64 = por %p62, %p63
      %p65 = scmp.ne.s32.totalorder %s54, %s57
      %p66 = scmp.eq.s32.totalorder %s23, 1
      %p67 = por %p65, %p66
      %p68 = scmp.ne.s32.totalorder %s57, %s58
      %p69 = scmp.eq.s32.totalorder %s23, 0
      %p70 = por %p68, %p69
      %p71 = scmp.ne.s32.totalorder %s57, %s58
      %p72 = scmp.eq.s32.totalorder %s24, 1
      %p73 = por %p71, %p72
      %p75 = scmp.ne.s32.totalorder %s58, %s74
      %p76 = scmp.eq.s32.totalorder %s24, 0
      %p77 = por %p75, %p76
      %s79 = sadd.s32 %s78, 1
      %p82 = scmp.eq.s32.totalorder %s18, 1
      %p83 = scmp.ne.s32.totalorder %s78, %s80
      %p84 = scmp.eq.s32.totalorder %s18, 0
      %p85 = por %p83, %p84
      %p86 = scmp.ne.s32.totalorder %s78, %s80
      %p87 = scmp.eq.s32.totalorder %s23, 1
      %p88 = por %p86, %p87
      %p89 = scmp.ne.s32.totalorder %s80, %s81
      %p90 = scmp.eq.s32.totalorder %s23, 0
      %p91 = por %p89, %p90
      %p92 = scmp.ne.s32.totalorder %s80, %s81
      %p93 = scmp.eq.s32.totalorder %s24, 1
      %p94 = por %p92, %p93
      %p96 = scmp.ne.s32.totalorder %s81, %s95
      %p97 = scmp.eq.s32.totalorder %s24, 0
      %p98 = por %p96, %p97
      %s100 = sadd.s32 %s99, 1
      %p103 = scmp.eq.s32.totalorder %s18, 1
      %p104 = scmp.ne.s32.totalorder %s99, %s101
      %p105 = scmp.eq.s32.totalorder %s18, 0
      %p106 = por %p104, %p105
      %p107 = scmp.ne.s32.totalorder %s99, %s101
      %p108 = scmp.eq.s32.totalorder %s23, 1
      %p109 = por %p107, %p108
      %p110 = scmp.ne.s32.totalorder %s101, %s102
      %p111 = scmp.eq.s32.totalorder %s23, 0
      %p112 = por %p110, %p111
      %p113 = scmp.ne.s32.totalorder %s101, %s102
      %p114 = scmp.eq.s32.totalorder %s24, 1
      %p115 = por %p113, %p114
      %p117 = scmp.ne.s32.totalorder %s102, %s116
      %p118 = scmp.eq.s32.totalorder %s24, 0
      %p119 = por %p117, %p118
      %s121 = sadd.s32 %s120, 1
      %p124 = scmp.eq.s32.totalorder %s18, 1
      %p125 = scmp.ne.s32.totalorder %s120, %s122
      %p126 = scmp.eq.s32.totalorder %s18, 0
      %p127 = por %p125, %p126
      %p128 = scmp.ne.s32.totalorder %s120, %s122
      %p129 = scmp.eq.s32.totalorder %s23, 1
      %p130 = por %p128, %p129
      %p131 = scmp.ne.s32.totalorder %s122, %s123
      %p132 = scmp.eq.s32.totalorder %s23, 0
      %p133 = por %p131, %p132
      %p134 = scmp.ne.s32.totalorder %s122, %s123
      %p135 = scmp.eq.s32.totalorder %s24, 1
      %p136 = por %p134, %p135
      %p138 = scmp.ne.s32.totalorder %s123, %s137
      %p139 = scmp.eq.s32.totalorder %s24, 0
      %p140 = por %p138, %p139
      %s142 = sadd.s32 %s141, 1
      %p145 = scmp.eq.s32.totalorder %s18, 1
      %p146 = scmp.ne.s32.totalorder %s141, %s143
      %p147 = scmp.eq.s32.totalorder %s18, 0
      %p148 = por %p146, %p147
      %p149 = scmp.ne.s32.totalorder %s141, %s143
      %p150 = scmp.eq.s32.totalorder %s23, 1
      %p151 = por %p149, %p150
      %p152 = scmp.ne.s32.totalorder %s143, %s144
      %p153 = scmp.eq.s32.totalorder %s23, 0
      %p154 = por %p152, %p153
      %p155 = scmp.ne.s32.totalorder %s143, %s144
      %p156 = scmp.eq.s32.totalorder %s24, 1
      %p157 = por %p155, %p156
      %p159 = scmp.ne.s32.totalorder %s144, %s158
      %p160 = scmp.eq.s32.totalorder %s24, 0
      %p161 = por %p159, %p160
      %s162 = ssub.s32 %s18, %s25
      %p163 = scmp.eq.s32.totalorder %s162, 0
      %s165 = sadd.s32 %s164, 1
      %s166 = scalar_select %p163, %s164, %s165
      %p169 = pneg %p163
      %p170 = scmp.eq.s32.totalorder %s18, 1
      %p171 = por %p169, %p170
      %p172 = scmp.ne.s32.totalorder %s164, %s167
      %p173 = scmp.eq.s32.totalorder %s18, 0
      %p174 = por %p172, %p173
      %p175 = scmp.ne.s32.totalorder %s164, %s167
      %p176 = scmp.eq.s32.totalorder %s23, 1
      %p177 = por %p175, %p176
      %p178 = scmp.ne.s32.totalorder %s167, %s168
      %p179 = scmp.eq.s32.totalorder %s23, 0
      %p180 = por %p178, %p179
      %p181 = scmp.ne.s32.totalorder %s167, %s168
      %p182 = scmp.eq.s32.totalorder %s24, 1
      %p183 = por %p181, %p182
      %p185 = scmp.ne.s32.totalorder %s168, %s184
      %p186 = scmp.eq.s32.totalorder %s24, 0
      %p187 = por %p185, %p186
      %p188 = scmp.le.s32.totalorder 1, %s18
      %p189 = scmp.lt.s32.totalorder %s18, 3
      %p190 = pnand %p188, %p189
      %p191 = pneg %p190
      // Predicated region
      $region9: #{tpu_custom_call.1} parent=5 // pred_check
        _
      $region10: #{tpu_custom_call.1} parent=5 // pred_check_branch
        %193 = sbr.rel (%p190) target = $region12
      $region11: #{tpu_custom_call.1} parent=5 // pred_region
        %s194 = ssub.s32 %s18, 1
        // Predicated region
        $region13: #{tpu_custom_call.1} parent=11 // pred_check
          %p195 = pneg %p91
        $region14: #{tpu_custom_call.1} parent=11 // pred_check_branch
          %197 = sbr.rel (%p195) target = $region16
        $region15: #{tpu_custom_call.1} parent=11 // pred_region
          _
        $region16: #{tpu_custom_call.1} parent=11 // pred_fallthru
          _
        // Predicated region
        $region17: #{tpu_custom_call.1} parent=11 // pred_check
          %p198 = pneg %p112
        $region18: #{tpu_custom_call.1} parent=11 // pred_check_branch
          %200 = sbr.rel (%p198) target = $region20
        $region19: #{tpu_custom_call.1} parent=11 // pred_region
          _
        $region20: #{tpu_custom_call.1} parent=11 // pred_fallthru
          _
        // Predicated region
        $region21: #{tpu_custom_call.1} parent=11 // pred_check
          %p201 = pneg %p133
        $region22: #{tpu_custom_call.1} parent=11 // pred_check_branch
          %203 = sbr.rel (%p201) target = $region24
        $region23: #{tpu_custom_call.1} parent=11 // pred_region
          _
        $region24: #{tpu_custom_call.1} parent=11 // pred_fallthru
          _
        // Predicated region
        $region25: #{tpu_custom_call.1} parent=11 // pred_check
          %p204 = pneg %p154
        $region26: #{tpu_custom_call.1} parent=11 // pred_check_branch
          %206 = sbr.rel (%p204) target = $region28
        $region27: #{tpu_custom_call.1} parent=11 // pred_region
          _
        $region28: #{tpu_custom_call.1} parent=11 // pred_fallthru
          _
      $region12: #{tpu_custom_call.1} parent=5 // pred_fallthru
        _
      %p207 = scmp.lt.s32.totalorder %s18, 2
      // Predicated region
      $region29: #{tpu_custom_call.1} parent=5 // pred_check
        %p208 = pneg %p207
      $region30: #{tpu_custom_call.1} parent=5 // pred_check_branch
        %210 = sbr.rel (%p208) target = $region32
      $region31: #{tpu_custom_call.1} parent=5 // pred_region
        // Predicated region
        $region33: #{tpu_custom_call.1} parent=31 // pred_check
          %p211 = pneg %p38
        $region34: #{tpu_custom_call.1} parent=31 // pred_check_branch
          %213 = sbr.rel (%p211) target = $region36
        $region35: #{tpu_custom_call.1} parent=31 // pred_region
          %s214 = smul.u32 2, %s18
          %p215 = scmp.lt.s32.totalorder %s214, 3
          %s216 = scalar_select %p215, %s214, 3
          %s217 = smul.addr %s216, 4
          %s218 = scalar_lea.vmem %s0, %s217
          %s219 = smul.u32 2, %s18
        $region36: #{tpu_custom_call.1} parent=31 // pred_fallthru
          _
        // Predicated region
        $region37: #{tpu_custom_call.1} parent=31 // pred_check
          %p220 = pneg %p64
        $region38: #{tpu_custom_call.1} parent=31 // pred_check_branch
          %222 = sbr.rel (%p220) target = $region40
        $region39: #{tpu_custom_call.1} parent=31 // pred_region
          %s223 = sand.u32 %s54, 1
          %s224 = scalar_lea.sflag [#allocation3], %s223
          %s225 = sand.u32 %s54, 1
          %s226 = smul.addr %s225, 16
          %s227 = scalar_lea.vmem [#allocation2], %s226
          %s228 = smul.u32 2, %s18
          %230 = vsyncadd %s224, 0
          %s231 = smul.addr %s228, 8
          %s232 = scalar_lea.hbm %s1, %s231
          %s233 = sshll.u32 %s232, 4
          %s234 = int_to_ptr.hbm [resolvable:$true] %s233
          %s235 = sshll.u32 %s227, 4
          %s236 = int_to_ptr.vmem [resolvable:$true] %s235
          %241 = dma.hbm_to_vmem [thread:$0]  %s234, 256, %s236, %s224, 128, 128, 8
        $region40: #{tpu_custom_call.1} parent=31 // pred_fallthru
          _
      $region32: #{tpu_custom_call.1} parent=5 // pred_fallthru
        _
      %p242 = scmp.le.s32.totalorder 1, %s18
      %p243 = scmp.lt.s32.totalorder %s18, 3
      %p244 = pnand %p242, %p243
      %p245 = pneg %p244
      // Predicated region
      $region41: #{tpu_custom_call.1} parent=5 // pred_check
        _
      $region42: #{tpu_custom_call.1} parent=5 // pred_check_branch
        %247 = sbr.rel (%p244) target = $region44
      $region43: #{tpu_custom_call.1} parent=5 // pred_region
        %s248 = ssub.s32 %s18, 1
        %s249 = sand.u32 %s57, 1
        %s250 = scalar_lea.sflag [#allocation3], %s249
        %s251 = sand.u32 %s57, 1
        %s252 = smul.addr %s251, 16
        %s253 = scalar_lea.vmem [#allocation2], %s252
        // Predicated region
        $region45: #{tpu_custom_call.1} parent=43 // pred_check
          %p254 = pneg %p70
        $region46: #{tpu_custom_call.1} parent=43 // pred_check_branch
          %256 = sbr.rel (%p254) target = $region48
        $region47: #{tpu_custom_call.1} parent=43 // pred_region
          %258 = dma.done %s250, 256
        $region48: #{tpu_custom_call.1} parent=43 // pred_fallthru
          _
        %s259 = smul.u32 2, %s23
        %p260 = scmp.lt.s32.totalorder %s259, 3
        %s261 = scalar_select %p260, %s259, 3
        %s262 = smul.addr %s261, 4
        %s263 = scalar_lea.vmem %s0, %s262
        %p264 = pneg %p44
        %p265 = pneg %p41
        %s266 = sand.u32 %s57, 1
        %s267 = scalar_lea.sflag [#allocation3], %s266
        %s268 = sand.u32 %s57, 1
        %s269 = smul.addr %s268, 16
        %s270 = scalar_lea.vmem [#allocation2], %s269
        %p271 = pneg %p70
        %p272 = pneg %p67
        %p273 = pneg %p91
        %p274 = pneg %p88
        %p275 = pneg %p112
        %p276 = pneg %p109
        %p277 = pneg %p133
        %p278 = pneg %p130
        %p279 = pneg %p154
        %p280 = pneg %p151
        %p281 = pneg %p180
        %p282 = pneg %p177
        %s283 = sand.u32 %s167, 1
        %s284 = scalar_lea.sflag [#allocation4], %s283
        %s285 = sand.u32 %s167, 1
        %s286 = smul.addr %s285, 16
        %s287 = scalar_lea.vmem [#allocation5], %s286
        %s288 = smul.u32 2, %s23
        %p289 = scmp.lt.s32.totalorder %s288, 3
        %s290 = scalar_select %p289, %s288, 3
        %s291 = smul.addr %s290, 4
        %s292 = scalar_lea.vmem %s0, %s291
        %s293 = smul.u32 2, %s23
        %s294 = smul.u32 2, %s23
        %s295 = smul.u32 2, %s23
        %v297 = vld [vmem:[%s292] sm:$0xf]
        %v298 = vld [vmem:[%s292 + $0x4] sm:$0xf]
        %v299 = vld [vmem:[%s253] sm:$0xff]
        %v300 = vld [vmem:[%s253 + $0x8] sm:$0xff]
        %v301 = vld [vmem:[%s2] sm:$0xf]
        %v302 = vld [vmem:[%s2 + $0x4] sm:$0xf]
        %v303 = vld [vmem:[%s3] sm:$0x1]
        %v305 = vperm.slane %v303, 0
        %v309 = vunpack.c.l.b16 %v297
        %v310 = vunpack.c.l.b16 %v298
        %v311 = vpack.c.b16 %v310, %v309
        %v314 = vunpack.c.l.b16 %v301
        %v315 = vunpack.c.l.b16 %v302
        %v316 = vpack.c.b16 %v315, %v314
        %vm318 = vcmask 130048
        %v320 = vsel %vm318, %v311, 0
        %322 = vmatpush.bf16.msra.mxu0 0
        %323 = vmatpush.bf16.msra.mxu0 0
        %324 = vmatpush.bf16.msra.mxu0 0
        %325 = vmatpush.bf16.msra.mxu0 0
        %326 = vmatpush.bf16.msra.mxu0 0
        %327 = vmatpush.bf16.msra.mxu0 0
        %328 = vmatpush.bf16.msra.mxu0 0
        %329 = vmatpush.bf16.msra.mxu0 %v316
        %330 = vmatmul.bf16.gmra.mxu0 %v320
        %v331 = vpop.f32.mrf.mxu0
        %v332 = vadd.f32 %v305, %v331
        %v333 = vpop.f32.mrf.mxu0
        %v334 = vadd.f32 %v305, %v333
        %335 = vdwg.mxu0
        %v336 = vpack.c.bf16 %v300, %v299
        %v337 = vld [vmem:[%s4] sm:$0xf]
        %v338 = vld [vmem:[%s4 + $0x4] sm:$0xf]
        %v339 = vld [vmem:[%s4 + $0x8] sm:$0xf]
        %v340 = vld [vmem:[%s4 + $0xc] sm:$0xf]
        %v341 = vld [vmem:[%s5] sm:$0x1]
        %v343 = vperm.slane %v341, 0
        %v349 = vunpack.c.l.b16 %v337
        %v350 = vunpack.c.l.b16 %v338
        %v351 = vunpack.c.l.b16 %v339
        %v352 = vunpack.c.l.b16 %v340
        %v353 = vpack.c.b16 %v350, %v349
        %v354 = vpack.c.b16 %v352, %v351
        %vm357 = vcmask 261120
        %v359 = vsel %vm357, %v336, 0
        %361 = vmatpush.bf16.msra.mxu0 0
        %362 = vmatpush.bf16.msra.mxu0 0
        %363 = vmatpush.bf16.msra.mxu0 0
        %364 = vmatpush.bf16.msra.mxu0 0
        %365 = vmatpush.bf16.msra.mxu0 0
        %366 = vmatpush.bf16.msra.mxu0 0
        %367 = vmatpush.bf16.msra.mxu0 %v354
        %368 = vmatpush.bf16.msra.mxu0 %v353
        %369 = vmatmul.bf16.gmra.mxu0 %v359
        %v370 = vpop.f32.mrf.mxu0
        %v371 = vadd.f32 %v343, %v370
        %v372 = vpop.f32.mrf.mxu0
        %v373 = vadd.f32 %v343, %v372
        %374 = vdwg.mxu0
        %vm375 = vcmask 523264
        %v376 = vsel %vm375, %v332, 0.0
        %377 = vadd.xlane.f32.xlu0 %v376
        %v378 = vpop.xlane.xlu0 %377
        %v379 = vsel %vm375, %v334, 0.0
        %380 = vadd.xlane.f32.xlu0 %v379
        %v381 = vpop.xlane.xlu0 %380
        %v382 = vrcp.pop 64.0
        %v383 = vmul.f32 64.0, %v382
        %v384 = vsub.f32 1.0, %v383
        %v385 = vmul.f32 %v382, %v384
        %v386 = vadd.f32 %v382, %v385
        %vm387 = vweird.f32 %v382
        %v388 = vsel %vm387, %v382, %v386
        %v389 = vmul.f32 %v378, %v388
        %v390 = vmul.f32 %v381, %v388
        %v391 = vsub.f32 %v332, %v389
        %v392 = vsub.f32 %v334, %v390
        %v393 = vmul.f32 %v391, %v391
        %v394 = vmul.f32 %v392, %v392
        %v395 = vsel %vm375, %v393, 0.0
        %396 = vadd.xlane.f32.xlu0 %v395
        %v397 = vpop.xlane.xlu0 %396
        %v398 = vsel %vm375, %v394, 0.0
        %399 = vadd.xlane.f32.xlu0 %v398
        %v400 = vpop.xlane.xlu0 %399
        %v401 = vmul.f32 %v397, %v388
        %v402 = vmul.f32 %v400, %v388
        %v403 = vadd.f32 %v401, 1e-05
        %v404 = vadd.f32 %v402, 1e-05
        %v405 = vrsqrt.pop %v403
        %v406 = vmul.f32 %v405, %v403
        %v407 = vmul.f32 %v406, %v405
        %v408 = vmul.f32 0.5, %v407
        %v409 = vsub.f32 1.5, %v408
        %v410 = vmul.f32 %v405, %v409
        %vm411 = vweird.f32 %v403
        %vm412 = vweird.f32 %v405
        %vm413 = vmor %vm411, %vm412
        %v414 = vsel %vm413, %v405, %v410
        %v415 = vrsqrt.pop %v404
        %v416 = vmul.f32 %v415, %v404
        %v417 = vmul.f32 %v416, %v415
        %v418 = vmul.f32 0.5, %v417
        %v419 = vsub.f32 1.5, %v418
        %v420 = vmul.f32 %v415, %v419
        %vm421 = vweird.f32 %v404
        %vm422 = vweird.f32 %v415
        %vm423 = vmor %vm421, %vm422
        %v424 = vsel %vm423, %v415, %v420
        %v425 = vmul.f32 %v391, %v414
        %v426 = vmul.f32 %v392, %v424
        %v427 = vsel %vm375, %v371, 0.0
        %428 = vadd.xlane.f32.xlu0 %v427
        %v429 = vpop.xlane.xlu0 %428
        %v430 = vsel %vm375, %v373, 0.0
        %431 = vadd.xlane.f32.xlu0 %v430
        %v432 = vpop.xlane.xlu0 %431
        %v433 = vmul.f32 %v429, %v388
        %v434 = vmul.f32 %v432, %v388
        %v435 = vsub.f32 %v371, %v433
        %v436 = vsub.f32 %v373, %v434
        %v437 = vmul.f32 %v435, %v435
        %v438 = vmul.f32 %v436, %v436
        %v439 = vsel %vm375, %v437, 0.0
        %440 = vadd.xlane.f32.xlu0 %v439
        %v441 = vpop.xlane.xlu0 %440
        %v442 = vsel %vm375, %v438, 0.0
        %443 = vadd.xlane.f32.xlu0 %v442
        %v444 = vpop.xlane.xlu0 %443
        %v445 = vmul.f32 %v441, %v388
        %v446 = vmul.f32 %v444, %v388
        %v447 = vadd.f32 %v445, 1e-05
        %v448 = vadd.f32 %v446, 1e-05
        %v449 = vrsqrt.pop %v447
        %v450 = vmul.f32 %v449, %v447
        %v451 = vmul.f32 %v450, %v449
        %v452 = vmul.f32 0.5, %v451
        %v453 = vsub.f32 1.5, %v452
        %v454 = vmul.f32 %v449, %v453
        %vm455 = vweird.f32 %v447
        %vm456 = vweird.f32 %v449
        %vm457 = vmor %vm455, %vm456
        %v458 = vsel %vm457, %v449, %v454
        %v459 = vrsqrt.pop %v448
        %v460 = vmul.f32 %v459, %v448
        %v461 = vmul.f32 %v460, %v459
        %v462 = vmul.f32 0.5, %v461
        %v463 = vsub.f32 1.5, %v462
        %v464 = vmul.f32 %v459, %v463
        %vm465 = vweird.f32 %v448
        %vm466 = vweird.f32 %v459
        %vm467 = vmor %vm465, %vm466
        %v468 = vsel %vm467, %v459, %v464
        %v469 = vmul.f32 %v435, %v458
        %v470 = vmul.f32 %v436, %v468
        %v471 = vadd.f32 %v425, %v469
        %v472 = vadd.f32 %v426, %v470
        %v473 = vxor.u32 %v471, 2147483648
        %v474 = vxor.u32 %v472, 2147483648
        %v475 = vmul.f32 %v473, 1.442695
        %v476 = vpow.pop %v475
        %v477 = vmul.f32 %v474, 1.442695
        %v478 = vpow.pop %v477
        %v479 = vadd.f32 %v476, 1.0
        %v480 = vadd.f32 %v478, 1.0
        %v481 = vrcp.pop %v479
        %v482 = vmul.f32 %v479, %v481
        %v483 = vsub.f32 1.0, %v482
        %v484 = vmul.f32 %v481, %v483
        %v485 = vadd.f32 %v481, %v484
        %vm486 = vweird.f32 %v479
        %vm487 = vweird.f32 %v481
        %vm488 = vmor %vm486, %vm487
        %v489 = vsel %vm488, %v481, %v485
        %v490 = vand.u32 2147483647, %v479
        %vm491 = vcmp.eq.f32.partialorder %v490, 8.507059e+37
        %v492 = vand.u32 %v479, 2147483648
        %v493 = vor.u32 1.1754944e-38, %v492
        %v494 = vsel %vm491, %v493, %v489
        %v495 = vmul.f32 1.0, %v494
        %v496 = vrcp.pop %v480
        %v497 = vmul.f32 %v480, %v496
        %v498 = vsub.f32 1.0, %v497
        %v499 = vmul.f32 %v496, %v498
        %v500 = vadd.f32 %v496, %v499
        %vm501 = vweird.f32 %v480
        %vm502 = vweird.f32 %v496
        %vm503 = vmor %vm501, %vm502
        %v504 = vsel %vm503, %v496, %v500
        %v505 = vand.u32 2147483647, %v480
        %vm506 = vcmp.eq.f32.partialorder %v505, 8.507059e+37
        %v507 = vand.u32 %v480, 2147483648
        %v508 = vor.u32 1.1754944e-38, %v507
        %v509 = vsel %vm506, %v508, %v504
        %v510 = vmul.f32 1.0, %v509
        %513 = vrot.lane.b32.xlu0 %v332, 64
        %v514 = vpop.permute.xlu0 %513
        %515 = vrot.lane.b32.xlu0 %v334, 64
        %v516 = vpop.permute.xlu0 %515
        %v519 = vsel %vm357, %v514, 0.0
        %520 = vadd.xlane.f32.xlu0 %v519
        %v521 = vpop.xlane.xlu0 %520
        %v522 = vsel %vm357, %v516, 0.0
        %523 = vadd.xlane.f32.xlu0 %v522
        %v524 = vpop.xlane.xlu0 %523
        %v525 = vrcp.pop 32.0
        %v526 = vmul.f32 32.0, %v525
        %v527 = vsub.f32 1.0, %v526
        %v528 = vmul.f32 %v525, %v527
        %v529 = vadd.f32 %v525, %v528
        %vm530 = vweird.f32 %v525
        %v531 = vsel %vm530, %v525, %v529
        %v532 = vmul.f32 %v521, %v531
        %v533 = vmul.f32 %v524, %v531
        %v534 = vsub.f32 %v332, %v532
        %v535 = vsub.f32 %v334, %v533
        %v536 = vmul.f32 %v534, %v534
        %v537 = vmul.f32 %v535, %v535
        %540 = vrot.lane.b32.xlu0 %v536, 64
        %v541 = vpop.permute.xlu0 %540
        %542 = vrot.lane.b32.xlu0 %v537, 64
        %v543 = vpop.permute.xlu0 %542
        %v546 = vsel %vm357, %v541, 0.0
        %547 = vadd.xlane.f32.xlu0 %v546
        %v548 = vpop.xlane.xlu0 %547
        %v549 = vsel %vm357, %v543, 0.0
        %550 = vadd.xlane.f32.xlu0 %v549
        %v551 = vpop.xlane.xlu0 %550
        %v552 = vmul.f32 %v548, %v531
        %v553 = vmul.f32 %v551, %v531
        %v554 = vadd.f32 %v552, 1e-05
        %v555 = vadd.f32 %v553, 1e-05
        %v556 = vrsqrt.pop %v554
        %v557 = vmul.f32 %v556, %v554
        %v558 = vmul.f32 %v557, %v556
        %v559 = vmul.f32 0.5, %v558
        %v560 = vsub.f32 1.5, %v559
        %v561 = vmul.f32 %v556, %v560
        %vm562 = vweird.f32 %v554
        %vm563 = vweird.f32 %v556
        %vm564 = vmor %vm562, %vm563
        %v565 = vsel %vm564, %v556, %v561
        %v566 = vrsqrt.pop %v555
        %v567 = vmul.f32 %v566, %v555
        %v568 = vmul.f32 %v567, %v566
        %v569 = vmul.f32 0.5, %v568
        %v570 = vsub.f32 1.5, %v569
        %v571 = vmul.f32 %v566, %v570
        %vm572 = vweird.f32 %v555
        %vm573 = vweird.f32 %v566
        %vm574 = vmor %vm572, %vm573
        %v575 = vsel %vm574, %v566, %v571
        %v576 = vmul.f32 %v534, %v565
        %v577 = vmul.f32 %v535, %v575
        %580 = vrot.lane.b32.xlu0 %v371, 64
        %v581 = vpop.permute.xlu0 %580
        %582 = vrot.lane.b32.xlu0 %v373, 64
        %v583 = vpop.permute.xlu0 %582
        %v586 = vsel %vm357, %v581, 0.0
        %587 = vadd.xlane.f32.xlu0 %v586
        %v588 = vpop.xlane.xlu0 %587
        %v589 = vsel %vm357, %v583, 0.0
        %590 = vadd.xlane.f32.xlu0 %v589
        %v591 = vpop.xlane.xlu0 %590
        %v592 = vmul.f32 %v588, %v531
        %v593 = vmul.f32 %v591, %v531
        %v594 = vsub.f32 %v371, %v592
        %v595 = vsub.f32 %v373, %v593
        %v596 = vmul.f32 %v594, %v594
        %v597 = vmul.f32 %v595, %v595
        %600 = vrot.lane.b32.xlu0 %v596, 64
        %v601 = vpop.permute.xlu0 %600
        %602 = vrot.lane.b32.xlu0 %v597, 64
        %v603 = vpop.permute.xlu0 %602
        %v606 = vsel %vm357, %v601, 0.0
        %607 = vadd.xlane.f32.xlu0 %v606
        %v608 = vpop.xlane.xlu0 %607
        %v609 = vsel %vm357, %v603, 0.0
        %610 = vadd.xlane.f32.xlu0 %v609
        %v611 = vpop.xlane.xlu0 %610
        %v612 = vmul.f32 %v608, %v531
        %v613 = vmul.f32 %v611, %v531
        %v614 = vadd.f32 %v612, 1e-05
        %v615 = vadd.f32 %v613, 1e-05
        %v616 = vrsqrt.pop %v614
        %v617 = vmul.f32 %v616, %v614
        %v618 = vmul.f32 %v617, %v616
        %v619 = vmul.f32 0.5, %v618
        %v620 = vsub.f32 1.5, %v619
        %v621 = vmul.f32 %v616, %v620
        %vm622 = vweird.f32 %v614
        %vm623 = vweird.f32 %v616
        %vm624 = vmor %vm622, %vm623
        %v625 = vsel %vm624, %v616, %v621
        %v626 = vrsqrt.pop %v615
        %v627 = vmul.f32 %v626, %v615
        %v628 = vmul.f32 %v627, %v626
        %v629 = vmul.f32 0.5, %v628
        %v630 = vsub.f32 1.5, %v629
        %v631 = vmul.f32 %v626, %v630
        %vm632 = vweird.f32 %v615
        %vm633 = vweird.f32 %v626
        %vm634 = vmor %vm632, %vm633
        %v635 = vsel %vm634, %v626, %v631
        %v636 = vmul.f32 %v594, %v625
        %v637 = vmul.f32 %v595, %v635
        %640 = vrot.lane.b32.xlu0 %v636, 96
        %v641 = vpop.permute.xlu0 %640
        %642 = vrot.lane.b32.xlu0 %v637, 96
        %v643 = vpop.permute.xlu0 %642
        %v646 = vmul.f32 %v495, %v641
        %v647 = vmul.f32 %v510, %v643
        %650 = vrot.lane.b32.xlu0 %v646, 32
        %v651 = vpop.permute.xlu0 %650
        %652 = vrot.lane.b32.xlu0 %v647, 32
        %v653 = vpop.permute.xlu0 %652
        %v656 = vadd.f32 %v576, %v651
        %v657 = vadd.f32 %v577, %v653
        %v658 = vtanh.pop %v656
        %v659 = vtanh.pop %v657
        %v660 = vsub.f32 1.0, %v495
        %v661 = vsub.f32 1.0, %v510
        %v662 = vmul.f32 %v660, %v299
        %v663 = vmul.f32 %v661, %v300
        %666 = vrot.lane.b32.xlu0 %v658, 64
        %v667 = vpop.permute.xlu0 %666
        %668 = vrot.lane.b32.xlu0 %v659, 64
        %v669 = vpop.permute.xlu0 %668
        %v672 = vmul.f32 %v495, %v667
        %v673 = vmul.f32 %v510, %v669
        %v674 = vadd.f32 %v662, %v672
        %v675 = vadd.f32 %v663, %v673
        %676 = vst.msk [vmem:[%s287] sm:$0xff] %vm357, %v674
        %677 = vst.msk [vmem:[%s287 + $0x8] sm:$0xff] %vm357, %v675
        %s678 = sand.u32 %s167, 1
        %s679 = scalar_lea.sflag [#allocation4], %s678
        %s680 = sand.u32 %s167, 1
        %s681 = smul.addr %s680, 16
        %s682 = scalar_lea.vmem [#allocation5], %s681
        // Predicated region
        $region49: #{tpu_custom_call.1} parent=43 // pred_check
          %p683 = pneg %p177
        $region50: #{tpu_custom_call.1} parent=43 // pred_check_branch
          %685 = sbr.rel (%p683) target = $region52
        $region51: #{tpu_custom_call.1} parent=43 // pred_region
          %s686 = smul.u32 2, %s23
          %688 = vsyncadd %s679, 0
          %s689 = smul.addr %s686, 8
          %s690 = scalar_lea.hbm %s6, %s689
          %s691 = sshll.u32 %s682, 4
          %s692 = int_to_ptr.vmem [resolvable:$true] %s691
          %s693 = sshll.u32 %s690, 4
          %s694 = int_to_ptr.hbm [resolvable:$true] %s693
          %699 = dma.vmem_to_hbm [thread:$0]  %s692, 256, %s694, %s679, 128, 128, 8
        $region52: #{tpu_custom_call.1} parent=43 // pred_fallthru
          _
      $region44: #{tpu_custom_call.1} parent=5 // pred_fallthru
        _
      %p700 = scmp.le.s32.totalorder 2, %s18
      // Predicated region
      $region53: #{tpu_custom_call.1} parent=5 // pred_check
        %p701 = pneg %p700
      $region54: #{tpu_custom_call.1} parent=5 // pred_check_branch
        %703 = sbr.rel (%p701) target = $region56
      $region55: #{tpu_custom_call.1} parent=5 // pred_region
        %s704 = ssub.s32 %s18, 2
        // Predicated region
        $region57: #{tpu_custom_call.1} parent=55 // pred_check
          %p705 = pneg %p183
        $region58: #{tpu_custom_call.1} parent=55 // pred_check_branch
          %707 = sbr.rel (%p705) target = $region60
        $region59: #{tpu_custom_call.1} parent=55 // pred_region
          %s708 = sand.u32 %s168, 1
          %s709 = scalar_lea.sflag [#allocation4], %s708
          %s710 = sand.u32 %s168, 1
          %s711 = smul.addr %s710, 16
          %s712 = scalar_lea.vmem [#allocation5], %s711
          %714 = dma.done %s709, 256
        $region60: #{tpu_custom_call.1} parent=55 // pred_fallthru
          _
      $region56: #{tpu_custom_call.1} parent=5 // pred_fallthru
        _
    $region6: #{tpu_custom_call.1} parent=1 // loop_footer
      %s22 = sadd.s32 1, %s18
    $region7: #{tpu_custom_call.1} parent=1 // loop_footer_branch
      %17 = sbr.rel target = $region3
    $region8: #{tpu_custom_call.1} parent=1 // loop_exit
      _
    %715 = vsyncpa [#allocation3], 1
    %s716 = scalar_lea.sflag [#allocation3], 1
    %717 = vsyncpa %s716, 1
    %718 = vsyncpa [#allocation4], 1
    %s719 = scalar_lea.sflag [#allocation4], 1
    %720 = vsyncpa %s719, 1

</llo_original>
